<compile_context>
chip_gen: v7x
topology: tpu7x:2x2x1
jax: 0.10.0
libtpu: 0.0.40
codegen_flags: <defaults>
</compile_context>

<pallas_src>
import jax
import jax.numpy as jnp
import numpy as np
from jax.experimental import pallas as pl
from jax.experimental.pallas import tpu as pltpu


def _round_up(x, m):
    return ((x + m - 1) // m) * m


# ----------------------------- Pallas kernel -------------------------------
def _dense_relu_kernel(x_ref, w_ref, b_ref, o_ref):
    # y = ReLU(x @ W_t + b).  x/W are bf16 MXU operands, accumulate in f32,
    # bias + ReLU epilogue in f32, cast only at the final store.
    y = jnp.dot(x_ref[...], w_ref[...], preferred_element_type=jnp.float32)
    y = y + b_ref[...]                      # (1, E) broadcasts over token rows
    o_ref[...] = jnp.maximum(y, 0.0).astype(o_ref.dtype)


def feat_dense_relu(x, w_t, b_row, *, tm=1024):
    """x: (M, E) float, w_t: (E, E) bf16 already (in, out), b_row: (1, E) f32."""
    M, E = x.shape
    x = x.astype(jnp.bfloat16)              # bf16 operand stream -> half the HBM read bytes

    # Token tile: large enough to reach the HBM roofline (>=512 rows measured
    # ~85%), small enough that 2x(x tile) + 2x(out tile) + resident W/b fits
    # comfortably in v7x's 64 MiB VMEM (tm=1024: ~1.5 MiB per buffered tile).
    tm = min(tm, _round_up(M, 8))
    m_pad = _round_up(M, tm)
    if m_pad != M:
        # padded rows compute relu(b) and are sliced off below
        x = jnp.pad(x, ((0, m_pad - M), (0, 0)))

    grid = (m_pad // tm,)
    out = pl.pallas_call(
        _dense_relu_kernel,
        out_shape=jax.ShapeDtypeStruct((m_pad, E), jnp.float32),
        grid_spec=pltpu.PrefetchScalarGridSpec(
            num_scalar_prefetch=0,
            grid=grid,
            in_specs=[
                pl.BlockSpec((tm, E), lambda i: (i, 0)),   # token tile, pipelined over grid
                pl.BlockSpec((E, E), lambda i: (0, 0)),    # weight: VMEM-resident across grid
                pl.BlockSpec((1, E), lambda i: (0, 0)),    # bias:   VMEM-resident across grid
            ],
            out_specs=pl.BlockSpec((tm, E), lambda i: (i, 0)),
        ),
        compiler_params=pltpu.CompilerParams(
            dimension_semantics=("parallel",),             # independent row tiles -> megacore shard
            vmem_limit_bytes=64 * 1024 * 1024),
        cost_estimate=pl.CostEstimate(
            flops=2 * m_pad * E * E,
            transcendentals=0,
            bytes_accessed=m_pad * E * (2 + 4) + E * E * 2 + E * 4),
    )(x, w_t, b_row)
    return out[:M] if m_pad != M else out


# ------------------------------ parameters ---------------------------------
def init_params(key, feature_dims, n_shapes, shape_dim, n_words, word_dim):
    E = (feature_dims['b'] + feature_dims['l'] + feature_dims['f']
         + shape_dim + word_dim)
    k1, k2, k3, k4 = jax.random.split(key, 4)
    w = jax.random.normal(k3, (E, E), jnp.float32) / jnp.sqrt(jnp.float32(E))
    b = jax.random.normal(k4, (E,), jnp.float32) * 0.01
    params = {
        # torch.nn.Embedding(len(idx2shape)+1, shape_dim) / (len(idx2word)+1, word_dim)
        'shape_emb': jax.random.normal(k1, (n_shapes + 1, shape_dim), jnp.float32),
        'word_emb':  jax.random.normal(k2, (n_words + 1, word_dim), jnp.float32),
        # torch.nn.Linear(E, E): weight (out, in), bias (out,)
        'w': w,                                         # f32 master copy (reference / training)
        'b': b,
        # hoisted kernel-side copies: transposed to (in, out), bf16; bias as (1, E) f32
        'w_t': w.T.astype(jnp.bfloat16),
        'b_row': b.reshape(1, E).astype(jnp.float32),
    }
    return params, E


# ------------------------------ forward pass --------------------------------
def feature_embedding_forward(params, basic_bits, len_ids, freq_ids,
                              shape_ids, word_ids, feature_dims):
    """Mirrors FeatureEmbedding.forward with use_features='wbslf', use_dense=True.

    basic_bits: (B, S, feature_dims['b'])  0/1 floats  (to_binary output)
    len_ids:    (B, S) int32, 1-based      (one_hot_encoded(len-1, dims['l']))
    freq_ids:   (B, S) int32, 1-based      (one_hot_encoded(freq-1, dims['f']))
    shape_ids:  (B, S) int32
    word_ids:   (B, S) int32
    returns:    (B, S, E) float32
    """
    B, S, _ = basic_bits.shape
    # TODO(synk): the flair Sentence/Token tag-extraction Python loop has no
    # tensor equivalent; ids / bit-vectors are assumed pre-extracted.
    len_onehot = jax.nn.one_hot(len_ids - 1, feature_dims['l'], dtype=jnp.float32)
    freq_onehot = jax.nn.one_hot(freq_ids - 1, feature_dims['f'], dtype=jnp.float32)
    shape_vec = params['shape_emb'][shape_ids]       # (B, S, shape_dim)
    word_vec = params['word_emb'][word_ids]          # (B, S, word_dim)

    feat = jnp.concatenate(
        [basic_bits.astype(jnp.float32), len_onehot, freq_onehot,
         shape_vec, word_vec], axis=-1)              # (B, S, E)
    E = feat.shape[-1]

    # TODO(synk): gather/one-hot/concat could be fused into the kernel with
    # scalar-prefetched ids to skip one HBM round trip of `feat`.
    x = feat.reshape(B * S, E)
    y = feat_dense_relu(x, params['w_t'], params['b_row'])
    return y.reshape(B, S, E)


# --------------------------------- main -------------------------------------
if __name__ == "__main__":
    # small shapes consistent with the module
    B, S = 2, 8
    feature_dims = {'b': 8, 'l': 12, 'f': 12}
    shape_dim, word_dim = 32, 64
    n_shapes, n_words = 20, 50          # len(idx2shape), len(idx2word)

    key = jax.random.PRNGKey(0)
    kp, kb, kl, kf, ks, kw = jax.random.split(key, 6)

    params, E = init_params(kp, feature_dims, n_shapes, shape_dim, n_words, word_dim)
    assert E == 128

    basic_bits = jax.random.bernoulli(kb, 0.5, (B, S, feature_dims['b'])).astype(jnp.float32)
    len_ids = jax.random.randint(kl, (B, S), 1, feature_dims['l'] + 1, dtype=jnp.int32)
    freq_ids = jax.random.randint(kf, (B, S), 1, feature_dims['f'] + 1, dtype=jnp.int32)
    shape_ids = jax.random.randint(ks, (B, S), 0, n_shapes + 1, dtype=jnp.int32)
    word_ids = jax.random.randint(kw, (B, S), 0, n_words + 1, dtype=jnp.int32)

    out = feature_embedding_forward(params, basic_bits, len_ids, freq_ids,
                                    shape_ids, word_ids, feature_dims)
    out = jax.block_until_ready(out)

    # pure-JAX f32 reference (bf16 MXU operands introduce ~1e-3 relative error,
    # inside the 1e-2 tolerances below)
    len_onehot = jax.nn.one_hot(len_ids - 1, feature_dims['l'], dtype=jnp.float32)
    freq_onehot = jax.nn.one_hot(freq_ids - 1, feature_dims['f'], dtype=jnp.float32)
    feat = jnp.concatenate([basic_bits, len_onehot, freq_onehot,
                            params['shape_emb'][shape_ids],
                            params['word_emb'][word_ids]], axis=-1)
    ref = jax.nn.relu(jnp.einsum('bse,oe->bso', feat, params['w']) + params['b'])
    np.testing.assert_allclose(np.asarray(out), np.asarray(ref), rtol=1e-2, atol=1e-2)

    assert out.shape == (B, S, E)
    print("KERNEL_OK")
</pallas_src>

<mosaic_0001>
module attributes {stable_mosaic.version = 11 : i64} {
  func.func @_dense_relu_kernel(%arg0: i32, %arg1: memref<16x128xbf16, #tpu.memory_space<vmem>>, %arg2: memref<128x128xbf16, #tpu.memory_space<vmem>>, %arg3: memref<1x128xf32, #tpu.memory_space<vmem>>, %arg4: memref<16x128xf32, #tpu.memory_space<vmem>>) attributes {dimension_semantics = [#tpu.dimension_semantics<parallel>], iteration_bounds = array<i64: 1>, scalar_prefetch = 0 : i64, scratch_operands = 0 : i64, tpu.core_type = #tpu.core_type<tc>, window_params = [{transform_indices = @transform_0, window_bounds = array<i64: 16, 128>}, {pipeline_mode = #tpu.pipeline_mode<synchronous>, transform_indices = @transform_1, window_bounds = array<i64: 128, 128>}, {pipeline_mode = #tpu.pipeline_mode<synchronous>, transform_indices = @transform_2, window_bounds = array<i64: 1, 128>}, {transform_indices = @transform_3, window_bounds = array<i64: 16, 128>}]} {
    %c0 = arith.constant 0 : index
    %c0_0 = arith.constant 0 : index
    %0 = vector.load %arg1[%c0, %c0_0] : memref<16x128xbf16, #tpu.memory_space<vmem>>, vector<16x128xbf16>
    %c0_1 = arith.constant 0 : index
    %c0_2 = arith.constant 0 : index
    %1 = vector.load %arg2[%c0_1, %c0_2] : memref<128x128xbf16, #tpu.memory_space<vmem>>, vector<128x128xbf16>
    %cst = arith.constant dense<0.000000e+00> : vector<16x128xf32>
    %2 = tpu.matmul %0, %1, %cst {dimension_numbers = #tpu.dot_dimension_numbers<[1], [0], [0], [1], [0, 0, 1, 1], [], []>} : vector<16x128xbf16>, vector<128x128xbf16>, vector<16x128xf32> -> vector<16x128xf32>
    %c0_3 = arith.constant 0 : index
    %c0_4 = arith.constant 0 : index
    %3 = vector.load %arg3[%c0_3, %c0_4] : memref<1x128xf32, #tpu.memory_space<vmem>>, vector<1x128xf32>
    %4 = vector.broadcast %3 : vector<1x128xf32> to vector<16x128xf32>
    %5 = arith.addf %2, %4 : vector<16x128xf32>
    %cst_5 = arith.constant 0.000000e+00 : f32
    %6 = vector.broadcast %cst_5 : f32 to vector<16x128xf32>
    %7 = arith.maximumf %5, %6 : vector<16x128xf32>
    %c0_6 = arith.constant 0 : index
    %c0_7 = arith.constant 0 : index
    %8 = vector.load %arg4[%c0_6, %c0_7] : memref<16x128xf32, #tpu.memory_space<vmem>>, vector<16x128xf32>
    tpu.vector_store %arg4[%c0_6, %c0_7], %7 {strides = array<i32>} : memref<16x128xf32, #tpu.memory_space<vmem>>, vector<16x128xf32>,
    return
  }
  func.func @transform_0(%arg0: i32) -> (i32, i32) {
    %c0_i32 = arith.constant 0 : i32
    %c0_i32_0 = arith.constant 0 : i32
    return %arg0, %c0_i32 : i32, i32
  }
  func.func @transform_1(%arg0: i32) -> (i32, i32) {
    %c0_i32 = arith.constant 0 : i32
    %c0_i32_0 = arith.constant 0 : i32
    %c0_i32_1 = arith.constant 0 : i32
    return %c0_i32, %c0_i32_0 : i32, i32
  }
  func.func @transform_2(%arg0: i32) -> (i32, i32) {
    %c0_i32 = arith.constant 0 : i32
    %c0_i32_0 = arith.constant 0 : i32
    %c0_i32_1 = arith.constant 0 : i32
    return %c0_i32, %c0_i32_0 : i32, i32
  }
  func.func @transform_3(%arg0: i32) -> (i32, i32) {
    %c0_i32 = arith.constant 0 : i32
    %c0_i32_0 = arith.constant 0 : i32
    return %arg0, %c0_i32 : i32, i32
  }
}

</mosaic_0001>

<llo_original>
// kernel: tpu_custom_call.1
$region0: #{tpu_custom_call.1}
  #allocation0 [shape = 'u32[]', space=smem, size = 0x4, offset = 0x4, fixed_abs, tag = 'smem constant byte address 0x4 - core index']
  #allocation1 [shape = 'u32[144,128]{1,0:T(1,128)}', space=vmem, size = 0x12000, scoped, tag = 'internal scratch']
  %s0 = inlined_call_operand.hbm [shape: bf16[16,128], index: 0, kind: input, shape index: {}]
  %s1 = inlined_call_operand.hbm [shape: bf16[128,128], index: 1, kind: input, shape index: {}]
  %s2 = inlined_call_operand.hbm [shape: f32[1,128], index: 2, kind: input, shape index: {}]
  %s3 = inlined_call_operand.hbm [shape: f32[16,128], index: 3, kind: output, shape index: {}]
  %s4 = sld [smem:[#allocation0]]
  $region34: #{tpu_custom_call.1} parent=0
    _
  %s6 = ssub.s32 1, %s4
  %s7 = scalar_select 0, %s6, %s4
  $region1: #{tpu_custom_call.1} parent=0
    #allocation2 [shape = 'u8[4096]{0}', space=vmem, size = 0x1000, scoped, tag = 'input window, operand 0, single buffered']
    #allocation3 [shape = 's32[1]{0}', space=sflag, size = 0x4, scoped, tag = 'scoped memory for tpu_custom_call.1']
    #allocation4 [shape = 's32[1]{0}', space=sflag, size = 0x4, scoped, tag = 'scoped memory for tpu_custom_call.1']
    #allocation5 [shape = 'u8[32768]{0}', space=vmem, size = 0x8000, scoped, tag = 'input window, operand 1, single buffered']
    #allocation6 [shape = 's32[1]{0}', space=sflag, size = 0x4, scoped, tag = 'scoped memory for tpu_custom_call.1']
    #allocation7 [shape = 'u8[512]{0}', space=vmem, size = 0x400, scoped, tag = 'input window, operand 2, single buffered']
    #allocation8 [shape = 'u8[8192]{0}', space=vmem, size = 0x2000, scoped, tag = 'output window, operand 0, single buffered']
    %8 = vsyncpa [#allocation3], 0
    %9 = vsyncpa [#allocation6], 0
    %10 = vsyncpa [#allocation4], 0
    // Predicated region
    $region2: #{tpu_custom_call.1} parent=1 // pred_check
      _
    $region3: #{tpu_custom_call.1} parent=1 // pred_check_branch
      %12 = sbr.rel (0) target = $region5
    $region4: #{tpu_custom_call.1} parent=1 // pred_region
      %s14 = ssub.s32 128, 128
      %15 = vsyncadd [#allocation3], %s14
      %s16 = sshll.u32 [#allocation2], 4
      %s17 = int_to_ptr.vmem [resolvable:$true] %s16
      %22 = dma.hbm_to_vmem [thread:$0]  %s0, 128, %s17, [#allocation3], 64, 64, 4
    $region5: #{tpu_custom_call.1} parent=1 // pred_fallthru
      _
    // Predicated region
    $region6: #{tpu_custom_call.1} parent=1 // pred_check
      _
    $region7: #{tpu_custom_call.1} parent=1 // pred_check_branch
      %24 = sbr.rel (0) target = $region9
    $region8: #{tpu_custom_call.1} parent=1 // pred_region
      %s26 = ssub.s32 1024, 1024
      %27 = vsyncadd [#allocation6], %s26
      %s28 = sshll.u32 [#allocation5], 4
      %s29 = int_to_ptr.vmem [resolvable:$true] %s28
      %34 = dma.hbm_to_vmem [thread:$0]  %s1, 1024, %s29, [#allocation6], 64, 64, 4
    $region9: #{tpu_custom_call.1} parent=1 // pred_fallthru
      _
    // Predicated region
    $region10: #{tpu_custom_call.1} parent=1 // pred_check
      _
    $region11: #{tpu_custom_call.1} parent=1 // pred_check_branch
      %36 = sbr.rel (0) target = $region13
    $region12: #{tpu_custom_call.1} parent=1 // pred_region
      %s38 = ssub.s32 16, 16
      %39 = vsyncadd [#allocation6], %s38
      %s41 = sshll.u32 [#allocation7], 4
      %s42 = int_to_ptr.vmem [resolvable:$true] %s41
      %44 = dma.hbm_to_vmem [thread:$0]  %s2, 16, %s42, [#allocation6]
    $region13: #{tpu_custom_call.1} parent=1 // pred_fallthru
      _
    // Predicated region
    $region14: #{tpu_custom_call.1} parent=1 // pred_check
      _
    $region15: #{tpu_custom_call.1} parent=1 // pred_check_branch
      %46 = sbr.rel (0) target = $region17
    $region16: #{tpu_custom_call.1} parent=1 // pred_region
      %47 = dma.done [#allocation3], 128
    $region17: #{tpu_custom_call.1} parent=1 // pred_fallthru
      _
    // Predicated region
    $region18: #{tpu_custom_call.1} parent=1 // pred_check
      _
    $region19: #{tpu_custom_call.1} parent=1 // pred_check_branch
      %49 = sbr.rel (0) target = $region21
    $region20: #{tpu_custom_call.1} parent=1 // pred_region
      %50 = dma.done [#allocation6], 1024
    $region21: #{tpu_custom_call.1} parent=1 // pred_fallthru
      _
    // Predicated region
    $region22: #{tpu_custom_call.1} parent=1 // pred_check
      _
    $region23: #{tpu_custom_call.1} parent=1 // pred_check_branch
      %52 = sbr.rel (0) target = $region25
    $region24: #{tpu_custom_call.1} parent=1 // pred_region
      %53 = dma.done [#allocation6], 16
    $region25: #{tpu_custom_call.1} parent=1 // pred_fallthru
      _
    %v55 = vld [vmem:[#allocation2] sm:$0xf]
    %v56 = vld [vmem:[#allocation2 + $0x4] sm:$0xf]
    %v57 = vld [vmem:[#allocation5] sm:$0xf]
    %v58 = vld [vmem:[#allocation5 + $0x4] sm:$0xf]
    %v59 = vld [vmem:[#allocation5 + $0x8] sm:$0xf]
    %v60 = vld [vmem:[#allocation5 + $0xc] sm:$0xf]
    %v61 = vld [vmem:[#allocation5 + $0x10] sm:$0xf]
    %v62 = vld [vmem:[#allocation5 + $0x14] sm:$0xf]
    %v63 = vld [vmem:[#allocation5 + $0x18] sm:$0xf]
    %v64 = vld [vmem:[#allocation5 + $0x1c] sm:$0xf]
    %v65 = vld [vmem:[#allocation5 + $0x20] sm:$0xf]
    %v66 = vld [vmem:[#allocation5 + $0x24] sm:$0xf]
    %v67 = vld [vmem:[#allocation5 + $0x28] sm:$0xf]
    %v68 = vld [vmem:[#allocation5 + $0x2c] sm:$0xf]
    %v69 = vld [vmem:[#allocation5 + $0x30] sm:$0xf]
    %v70 = vld [vmem:[#allocation5 + $0x34] sm:$0xf]
    %v71 = vld [vmem:[#allocation5 + $0x38] sm:$0xf]
    %v72 = vld [vmem:[#allocation5 + $0x3c] sm:$0xf]
    %v73 = vld [vmem:[#allocation7] sm:$0x1]
    %v75 = vlaneseq
    %v76 = vshrl.u32 %v75, 7
    %v77 = vsub.s32 0, %v76
    %v78 = vrot.slane %v73, %v77
    %v82 = vunpack.c.l.b16 %v55
    %v83 = vunpack.c.l.b16 %v56
    %v84 = vpack.c.b16 %v83, %v82
    %v102 = vunpack.c.l.b16 %v57
    %v103 = vunpack.c.l.b16 %v58
    %v104 = vunpack.c.l.b16 %v59
    %v105 = vunpack.c.l.b16 %v60
    %v106 = vunpack.c.l.b16 %v61
    %v107 = vunpack.c.l.b16 %v62
    %v108 = vunpack.c.l.b16 %v63
    %v109 = vunpack.c.l.b16 %v64
    %v110 = vunpack.c.l.b16 %v65
    %v111 = vunpack.c.l.b16 %v66
    %v112 = vunpack.c.l.b16 %v67
    %v113 = vunpack.c.l.b16 %v68
    %v114 = vunpack.c.l.b16 %v69
    %v115 = vunpack.c.l.b16 %v70
    %v116 = vunpack.c.l.b16 %v71
    %v117 = vunpack.c.l.b16 %v72
    %v118 = vpack.c.b16 %v103, %v102
    %v119 = vpack.c.b16 %v105, %v104
    %v120 = vpack.c.b16 %v107, %v106
    %v121 = vpack.c.b16 %v109, %v108
    %v122 = vpack.c.b16 %v111, %v110
    %v123 = vpack.c.b16 %v113, %v112
    %v124 = vpack.c.b16 %v115, %v114
    %v125 = vpack.c.b16 %v117, %v116
    %134 = vmatprep.subr.bf16.mxu0 0
    %135 = vmatpush1.bf16.msra.mxu0 %v118
    %136 = vmatprep.subr.bf16.mxu0 0
    %137 = vmatpush1.bf16.msra.mxu0 %v119
    %138 = vmatprep.subr.bf16.mxu0 0
    %139 = vmatpush1.bf16.msra.mxu0 %v120
    %140 = vmatprep.subr.bf16.mxu0 0
    %141 = vmatpush1.bf16.msra.mxu0 %v121
    %142 = vmatprep.subr.bf16.mxu0 0
    %143 = vmatpush1.bf16.msra.mxu0 %v122
    %144 = vmatprep.subr.bf16.mxu0 0
    %145 = vmatpush1.bf16.msra.mxu0 %v123
    %146 = vmatprep.subr.bf16.mxu0 0
    %147 = vmatpush1.bf16.msra.mxu0 %v124
    %148 = vmatprep.subr.bf16.mxu0 0
    %149 = vmatpush1.bf16.msra.mxu0 %v125
    %150 = vmatprep.subr.bf16.mxu0 0
    %151 = vmatpush1.bf16.msra.mxu0 0
    %152 = vmatprep.subr.bf16.mxu0 0
    %153 = vmatpush1.bf16.msra.mxu0 0
    %154 = vmatprep.subr.bf16.mxu0 0
    %155 = vmatpush1.bf16.msra.mxu0 0
    %156 = vmatprep.subr.bf16.mxu0 0
    %157 = vmatpush1.bf16.msra.mxu0 0
    %158 = vmatprep.subr.bf16.mxu0 0
    %159 = vmatpush1.bf16.msra.mxu0 0
    %160 = vmatprep.subr.bf16.mxu0 0
    %161 = vmatpush1.bf16.msra.mxu0 0
    %162 = vmatprep.subr.bf16.mxu0 0
    %163 = vmatpush1.bf16.msra.mxu0 0
    %164 = vmatprep.subr.bf16.mxu0 0
    %165 = vmatpush1.bf16.msra.mxu0 0
    %166 = vmatprep.mubr.bf16.mxu0 0
    %167 = vmatmul.mubr.bf16.gmra.mrb[0].mxu0 %v84
    %v168 = vpop.f32.mrb[0].mxu0
    %v169 = vadd.f32 %v78, %v168
    %v170 = vpop.f32.mrb[0].mxu0
    %v171 = vpop.f32.mrb[0].mxu0
    %v172 = vadd.f32 %v78, %v171
    %v173 = vpop.f32.mrb[0].mxu0
    %174 = vdwg.mxu0
    %v175 = vmax.f32 %v169, 0.0
    %v176 = vmax.f32 %v172, 0.0
    %177 = vst [vmem:[#allocation8] sm:$0xff] %v175
    %178 = vst [vmem:[#allocation8 + $0x8] sm:$0xff] %v176
    // Predicated region
    $region26: #{tpu_custom_call.1} parent=1 // pred_check
      _
    $region27: #{tpu_custom_call.1} parent=1 // pred_check_branch
      %180 = sbr.rel (0) target = $region29
    $region28: #{tpu_custom_call.1} parent=1 // pred_region
      %s182 = ssub.s32 256, 256
      %183 = vsyncadd [#allocation4], %s182
      %s184 = sshll.u32 [#allocation8], 4
      %s185 = int_to_ptr.vmem [resolvable:$true] %s184
      %190 = dma.vmem_to_hbm [thread:$0]  %s185, 256, %s3, [#allocation4], 128, 128, 8
    $region29: #{tpu_custom_call.1} parent=1 // pred_fallthru
      _
    // Predicated region
    $region30: #{tpu_custom_call.1} parent=1 // pred_check
      _
    $region31: #{tpu_custom_call.1} parent=1 // pred_check_branch
      %192 = sbr.rel (0) target = $region33
    $region32: #{tpu_custom_call.1} parent=1 // pred_region
      %193 = dma.done [#allocation4], 256
    $region33: #{tpu_custom_call.1} parent=1 // pred_fallthru
      _
    %194 = vsyncpa [#allocation3], 1
    %195 = vsyncpa [#allocation6], 1
    %196 = vsyncpa [#allocation4], 1

</llo_original>
